<compile_context>
chip_gen: v5e
topology: v5e:2x2
jax: 0.10.0
libtpu: 0.0.40
codegen_flags: <defaults>
</compile_context>

<pallas_src>
import jax
import jax.numpy as jnp
from jax.experimental import pallas as pl
from jax.experimental.pallas import tpu as pltpu


# ----------------------------------------------------------------------------
# Pallas kernel: full Critic forward, single invocation, all weights in VMEM.
# ----------------------------------------------------------------------------
def critic_kernel(
    x_ref,   # (B, XW)        bf16  packed [state | action] rows (XW = 128)
    w_ref,   # (XW+256, 384)  bf16  packed weight slab (see pack_critic_params)
    m_ref,   # (6, 256)       f32   packed biases + joint_fc3 row
    q_ref,   # out: (B, 1)    f32
):
    f32, bf16 = jnp.float32, jnp.bfloat16
    xw = x_ref.shape[1]

    x = x_ref[...]                                                   # (B, XW)

    # Fused first stage: [state_fc1 | action_fc1] in a single matmul,
    # the packed input is streamed into the MXU exactly once.
    y = jnp.dot(x, w_ref[0:xw, :], preferred_element_type=f32)       # (B, 384)

    # state_fc1 + ReLU (dropout p=0.2, training=False -> identity)
    s1 = jnp.maximum(y[:, 0:256] + m_ref[0:1, :], 0.0)               # (B, 256)
    # action_fc1 + ReLU
    a_feat = jnp.maximum(y[:, 256:384] + m_ref[1:2, 128:256], 0.0)   # (B, 128)

    # state_fc2 + ReLU (no zero columns multiplied)
    s2 = jnp.maximum(
        jnp.dot(s1.astype(bf16), w_ref[xw:xw + 256, 0:128],
                preferred_element_type=f32) + m_ref[1:2, 0:128], 0.0)  # (B, 128)

    # combined = cat([state_features, action_features]) -> lane-aligned concat
    sa = jnp.concatenate([s2, a_feat], axis=-1).astype(bf16)          # (B, 256)

    # joint_fc1 + ReLU
    j1 = jnp.maximum(
        jnp.dot(sa, w_ref[xw:xw + 256, 128:256],
                preferred_element_type=f32) + m_ref[2:3, 0:128], 0.0)  # (B, 128)

    # joint_fc2 + ReLU (output padded 64 -> 128 with zero weights/bias)
    j2 = jnp.maximum(
        jnp.dot(j1.astype(bf16), w_ref[xw:xw + 128, 256:384],
                preferred_element_type=f32) + m_ref[3:4, 0:128], 0.0)  # (B, 128)

    # joint_fc3 as VPU multiply + cross-lane reduction (kept off the MXU).
    q_ref[...] = (jnp.sum(j2 * m_ref[5:6, 0:128], axis=-1, keepdims=True)
                  + m_ref[4:5, 0:1])


# ----------------------------------------------------------------------------
# Canonical fp32 parameters (deterministic xavier_uniform, zero bias),
# stored pre-transposed to (fan_in, fan_out) so forward is y = x @ W + b.
# ----------------------------------------------------------------------------
def xavier_uniform(key, fan_in, fan_out):
    bound = (6.0 / (fan_in + fan_out)) ** 0.5
    return jax.random.uniform(key, (fan_in, fan_out), jnp.float32, -bound, bound)


def make_critic_params(key, state_input_dim, action_dim):
    ks = jax.random.split(key, 6)
    return {
        "w_s1": xavier_uniform(ks[0], state_input_dim, 256),
        "b_s1": jnp.zeros((1, 256), jnp.float32),
        "w_s2": xavier_uniform(ks[1], 256, 128),
        "b_s2": jnp.zeros((1, 128), jnp.float32),
        "w_a1": xavier_uniform(ks[2], action_dim, 128),
        "b_a1": jnp.zeros((1, 128), jnp.float32),
        "w_j1": xavier_uniform(ks[3], 256, 128),
        "b_j1": jnp.zeros((1, 128), jnp.float32),
        "w_j2": xavier_uniform(ks[4], 128, 64),
        "b_j2": jnp.zeros((1, 64), jnp.float32),
        "w_j3": xavier_uniform(ks[5], 64, 1),
        "b_j3": jnp.zeros((1, 1), jnp.float32),
    }


def _round_up_128(n):
    return max(128, ((n + 127) // 128) * 128)


# ----------------------------------------------------------------------------
# One-time weight preprocessing (hoisted out of the per-call hot path).
# ----------------------------------------------------------------------------
def pack_critic_params(params):
    f32, bf16 = jnp.float32, jnp.bfloat16
    s_in, h1 = params["w_s1"].shape            # 40, 256
    a_in, h2 = params["w_a1"].shape            # 16, 128
    hj2 = params["w_j2"].shape[1]              # 64
    assert h1 == 256 and h2 == 128 and params["w_j1"].shape == (256, 128)
    assert params["w_j2"].shape[0] == 128 and hj2 == 64

    # state + action share a single 128-lane pad.
    xw = _round_up_128(s_in + a_in)

    # One packed bf16 weight slab -> one HBM->VMEM DMA per call:
    #   rows 0:xw        cols 0:256    state_fc1   (rows 0:s_in real)
    #   rows 0:xw        cols 256:384  action_fc1  (rows s_in:s_in+a_in real)
    #   rows xw:xw+256   cols 0:128    state_fc2
    #   rows xw:xw+256   cols 128:256  joint_fc1
    #   rows xw:xw+128   cols 256:320  joint_fc2   (cols 320:384 zero pad)
    W = jnp.zeros((xw + 256, 384), f32)
    W = W.at[:s_in, 0:256].set(params["w_s1"])
    W = W.at[s_in:s_in + a_in, 256:384].set(params["w_a1"])
    W = W.at[xw:xw + 256, 0:128].set(params["w_s2"])
    W = W.at[xw:xw + 256, 128:256].set(params["w_j1"])
    W = W.at[xw:xw + 128, 256:256 + hj2].set(params["w_j2"])

    # One f32 meta slab: biases + joint_fc3 row (used as a VPU reduction).
    M = jnp.zeros((6, 256), f32)
    M = M.at[0, :].set(jnp.reshape(params["b_s1"], (-1,)))
    M = M.at[1, 0:128].set(jnp.reshape(params["b_s2"], (-1,)))
    M = M.at[1, 128:256].set(jnp.reshape(params["b_a1"], (-1,)))
    M = M.at[2, 0:128].set(jnp.reshape(params["b_j1"], (-1,)))
    M = M.at[3, 0:hj2].set(jnp.reshape(params["b_j2"], (-1,)))
    M = M.at[4, 0].set(jnp.reshape(params["b_j3"], (-1,))[0])
    M = M.at[5, 0:hj2].set(jnp.reshape(params["w_j3"], (-1,)))

    return {"w": W.astype(bf16), "m": M}


# ----------------------------------------------------------------------------
# pallas_call wrapper + jitted forward (single-sample and batched).
# ----------------------------------------------------------------------------
def _critic_pallas(kp, x_packed, *, block_b=1024):
    bsz = x_packed.shape[0]
    if bsz <= block_b:
        # Small batch: no grid (a grid would be a serial loop = pure overhead).
        vmem = pl.BlockSpec(memory_space=pltpu.MemorySpace.VMEM)
        return pl.pallas_call(
            critic_kernel,
            out_shape=jax.ShapeDtypeStruct((bsz, 1), jnp.float32),
            in_specs=[vmem, vmem, vmem],
            out_specs=vmem,
        )(x_packed, kp["w"], kp["m"])

    # Large batch: grid over the batch axis, marked "parallel" so v7x's two
    # TensorCores split it; also bounds per-step VMEM (v7x has 64 MiB).
    bpad = pl.cdiv(bsz, block_b) * block_b
    if bpad != bsz:
        x_packed = jnp.pad(x_packed, ((0, bpad - bsz), (0, 0)))
    wr, wc = kp["w"].shape
    q = pl.pallas_call(
        critic_kernel,
        out_shape=jax.ShapeDtypeStruct((bpad, 1), jnp.float32),
        grid_spec=pltpu.PrefetchScalarGridSpec(
            num_scalar_prefetch=0,
            grid=(bpad // block_b,),
            in_specs=[
                pl.BlockSpec((block_b, x_packed.shape[1]), lambda i: (i, 0)),
                pl.BlockSpec((wr, wc), lambda i: (0, 0)),
                pl.BlockSpec((6, 256), lambda i: (0, 0)),
            ],
            out_specs=pl.BlockSpec((block_b, 1), lambda i: (i, 0)),
        ),
        compiler_params=pltpu.CompilerParams(
            dimension_semantics=("parallel",)),
    )(x_packed, kp["w"], kp["m"])
    return q[:bsz]


def _pack_input_row(pieces, xw):
    """Single concat + pad + cast: [state parts..., action] -> (xw,) bf16."""
    flat = jnp.concatenate(
        [jnp.reshape(p, (-1,)).astype(jnp.float32) for p in pieces])
    return jnp.pad(flat, (0, xw - flat.shape[0])).astype(jnp.bfloat16)


@jax.jit
def critic_forward(kp, dynamic_re, static_re, task_em, neighbor_matrix,
                   r_mask, action):
    """Single-sample forward matching the torch module: returns q of shape (1,)."""
    xw = kp["w"].shape[0] - 256
    x = _pack_input_row(
        (dynamic_re, static_re, task_em, neighbor_matrix, r_mask, action), xw)
    return _critic_pallas(kp, x[None, :])[0]


@jax.jit
def critic_forward_batched(kp, x_packed):
    """Batched forward on pre-packed (B, XW) bf16 rows -> (B, 1) q values."""
    return _critic_pallas(kp, x_packed)


# ----------------------------------------------------------------------------
# Pure-JAX fp32 references (mirror the torch module in eval mode).
# ----------------------------------------------------------------------------
def critic_ref_packed(params, x_f32):
    """Reference on (B, s_in + a_in) f32 rows packed as [state | action]."""
    s_in = params["w_s1"].shape[0]
    a_in = params["w_a1"].shape[0]
    s = x_f32[:, :s_in]
    a = x_f32[:, s_in:s_in + a_in]
    h = jax.nn.relu(s @ params["w_s1"] + params["b_s1"])
    sf = jax.nn.relu(h @ params["w_s2"] + params["b_s2"])
    af = jax.nn.relu(a @ params["w_a1"] + params["b_a1"])
    c = jnp.concatenate([sf, af], axis=-1)
    j = jax.nn.relu(c @ params["w_j1"] + params["b_j1"])
    j = jax.nn.relu(j @ params["w_j2"] + params["b_j2"])
    return j @ params["w_j3"] + params["b_j3"]


def critic_forward_ref(params, dynamic_re, static_re, task_em,
                       neighbor_matrix, r_mask, action):
    x = jnp.concatenate([jnp.reshape(p, (-1,)).astype(jnp.float32)
                         for p in (dynamic_re, static_re, task_em,
                                   neighbor_matrix, r_mask, action)])
    return critic_ref_packed(params, x[None, :])[0]


if __name__ == "__main__":
    # args: device_num=4, neighbors_num=3
    device_num, neighbors_num = 4, 3
    state_input_dim = (device_num * device_num      # dynamic_re
                       + device_num                 # static_re
                       + device_num                 # task_em
                       + device_num                 # r_mask
                       + device_num * neighbors_num)  # neighbor_matrix -> 40
    action_dim = device_num * (neighbors_num + 1)      # 16

    key = jax.random.PRNGKey(0)
    kp_key, data_key = jax.random.split(key)
    params = make_critic_params(kp_key, state_input_dim, action_dim)
    kernel_params = pack_critic_params(params)   # one-time hoisted preprocessing
    xw = kernel_params["w"].shape[0] - 256       # 128 packed input lanes

    def make_inputs(k):
        k1, k2, k3, k4, k5, k6 = jax.random.split(k, 6)
        return (
            jax.random.normal(k1, (device_num, device_num), jnp.float32),
            jax.random.normal(k2, (device_num,), jnp.float32),
            jax.random.normal(k3, (device_num,), jnp.float32),
            jax.random.normal(k4, (device_num, neighbors_num), jnp.float32),
            jax.random.normal(k5, (device_num,), jnp.float32),
            jax.random.normal(k6, (device_num, neighbors_num + 1), jnp.float32),
        )

    # --- single-sample path (module semantics: q shape (1,)) ---------------
    inputs0 = make_inputs(data_key)
    q = critic_forward(kernel_params, *inputs0)
    jax.block_until_ready(q)
    q_ref = critic_forward_ref(params, *inputs0)
    assert q.shape == (1,)
    assert jnp.allclose(q, q_ref, atol=3e-2, rtol=3e-2), (q, q_ref)

    # --- small batch (B=8): same kernel body, ungridded --------------------
    B = 8
    xb_f32 = jax.random.normal(jax.random.PRNGKey(1),
                               (B, state_input_dim + action_dim), jnp.float32)
    xb = jnp.pad(xb_f32, ((0, 0), (0, xw - xb_f32.shape[1]))).astype(jnp.bfloat16)
    q_batch = critic_forward_batched(kernel_params, xb)
    jax.block_until_ready(q_batch)
    q_batch_ref = critic_ref_packed(params, xb_f32)
    assert q_batch.shape == (B, 1)
    assert jnp.allclose(q_batch, q_batch_ref, atol=3e-2, rtol=3e-2), (
        q_batch, q_batch_ref)

    # --- large batch: gridded path ("parallel" batch axis, bounded VMEM) ---
    Bg, blk = 384, 128
    xg_f32 = jax.random.normal(jax.random.PRNGKey(2),
                               (Bg, state_input_dim + action_dim), jnp.float32)
    xg = jnp.pad(xg_f32, ((0, 0), (0, xw - xg_f32.shape[1]))).astype(jnp.bfloat16)
    q_grid = jax.jit(
        lambda kp_, x_: _critic_pallas(kp_, x_, block_b=blk))(kernel_params, xg)
    jax.block_until_ready(q_grid)
    q_grid_ref = critic_ref_packed(params, xg_f32)
    assert q_grid.shape == (Bg, 1)
    assert jnp.allclose(q_grid, q_grid_ref, atol=3e-2, rtol=3e-2), (
        q_grid, q_grid_ref)

    print("KERNEL_OK")
</pallas_src>

<mosaic_0001>
module attributes {stable_mosaic.version = 11 : i64} {
  func.func @critic_kernel(%arg0: memref<1x128xbf16, #tpu.memory_space<vmem>>, %arg1: memref<384x384xbf16, #tpu.memory_space<vmem>>, %arg2: memref<6x256xf32, #tpu.memory_space<vmem>>, %arg3: memref<1x1xf32, #tpu.memory_space<vmem>>) attributes {dimension_semantics = [], scalar_prefetch = 0 : i64, scratch_operands = 0 : i64, tpu.core_type = #tpu.core_type<tc>} {
    %c0 = arith.constant 0 : index
    %c0_0 = arith.constant 0 : index
    %0 = vector.load %arg0[%c0, %c0_0] : memref<1x128xbf16, #tpu.memory_space<vmem>>, vector<1x128xbf16>
    %c0_1 = arith.constant 0 : index
    %c0_2 = arith.constant 0 : index
    %1 = vector.load %arg1[%c0_1, %c0_2] : memref<384x384xbf16, #tpu.memory_space<vmem>>, vector<128x384xbf16>
    %cst = arith.constant dense<0.000000e+00> : vector<1x384xf32>
    %2 = tpu.matmul %0, %1, %cst {dimension_numbers = #tpu.dot_dimension_numbers<[1], [0], [0], [1], [0, 0, 1, 1], [], []>} : vector<1x128xbf16>, vector<128x384xbf16>, vector<1x384xf32> -> vector<1x384xf32>
    %3 = vector.extract_strided_slice %2 {offsets = [0, 0], sizes = [1, 256], strides = [1, 1]} : vector<1x384xf32> to vector<1x256xf32>
    %c0_3 = arith.constant 0 : index
    %c0_4 = arith.constant 0 : index
    %4 = vector.load %arg2[%c0_3, %c0_4] : memref<6x256xf32, #tpu.memory_space<vmem>>, vector<1x256xf32>
    %5 = arith.addf %3, %4 : vector<1x256xf32>
    %cst_5 = arith.constant 0.000000e+00 : f32
    %6 = vector.broadcast %cst_5 : f32 to vector<1x256xf32>
    %7 = arith.maximumf %5, %6 : vector<1x256xf32>
    %8 = vector.extract_strided_slice %2 {offsets = [0, 256], sizes = [1, 128], strides = [1, 1]} : vector<1x384xf32> to vector<1x128xf32>
    %c1 = arith.constant 1 : index
    %c128 = arith.constant 128 : index
    %9 = vector.load %arg2[%c1, %c128] : memref<6x256xf32, #tpu.memory_space<vmem>>, vector<1x128xf32>
    %10 = arith.addf %8, %9 : vector<1x128xf32>
    %cst_6 = arith.constant 0.000000e+00 : f32
    %11 = vector.broadcast %cst_6 : f32 to vector<1x128xf32>
    %12 = arith.maximumf %10, %11 : vector<1x128xf32>
    %13 = arith.truncf %7 : vector<1x256xf32> to vector<1x256xbf16>
    %c128_7 = arith.constant 128 : index
    %c0_8 = arith.constant 0 : index
    %14 = vector.load %arg1[%c128_7, %c0_8] : memref<384x384xbf16, #tpu.memory_space<vmem>>, vector<256x128xbf16>
    %cst_9 = arith.constant dense<0.000000e+00> : vector<1x128xf32>
    %15 = tpu.matmul %13, %14, %cst_9 {dimension_numbers = #tpu.dot_dimension_numbers<[1], [0], [0], [1], [0, 0, 1, 1], [], []>} : vector<1x256xbf16>, vector<256x128xbf16>, vector<1x128xf32> -> vector<1x128xf32>
    %c1_10 = arith.constant 1 : index
    %c0_11 = arith.constant 0 : index
    %16 = vector.load %arg2[%c1_10, %c0_11] : memref<6x256xf32, #tpu.memory_space<vmem>>, vector<1x128xf32>
    %17 = arith.addf %15, %16 : vector<1x128xf32>
    %cst_12 = arith.constant 0.000000e+00 : f32
    %18 = vector.broadcast %cst_12 : f32 to vector<1x128xf32>
    %19 = arith.maximumf %17, %18 : vector<1x128xf32>
    %20 = tpu.concatenate %19, %12 in 1 : vector<1x128xf32>, vector<1x128xf32> -> vector<1x256xf32>
    %21 = arith.truncf %20 : vector<1x256xf32> to vector<1x256xbf16>
    %c128_13 = arith.constant 128 : index
    %c128_14 = arith.constant 128 : index
    %22 = vector.load %arg1[%c128_13, %c128_14] : memref<384x384xbf16, #tpu.memory_space<vmem>>, vector<256x128xbf16>
    %cst_15 = arith.constant dense<0.000000e+00> : vector<1x128xf32>
    %23 = tpu.matmul %21, %22, %cst_15 {dimension_numbers = #tpu.dot_dimension_numbers<[1], [0], [0], [1], [0, 0, 1, 1], [], []>} : vector<1x256xbf16>, vector<256x128xbf16>, vector<1x128xf32> -> vector<1x128xf32>
    %c2 = arith.constant 2 : index
    %c0_16 = arith.constant 0 : index
    %24 = vector.load %arg2[%c2, %c0_16] : memref<6x256xf32, #tpu.memory_space<vmem>>, vector<1x128xf32>
    %25 = arith.addf %23, %24 : vector<1x128xf32>
    %cst_17 = arith.constant 0.000000e+00 : f32
    %26 = vector.broadcast %cst_17 : f32 to vector<1x128xf32>
    %27 = arith.maximumf %25, %26 : vector<1x128xf32>
    %28 = arith.truncf %27 : vector<1x128xf32> to vector<1x128xbf16>
    %c128_18 = arith.constant 128 : index
    %c256 = arith.constant 256 : index
    %29 = vector.load %arg1[%c128_18, %c256] : memref<384x384xbf16, #tpu.memory_space<vmem>>, vector<128x128xbf16>
    %cst_19 = arith.constant dense<0.000000e+00> : vector<1x128xf32>
    %30 = tpu.matmul %28, %29, %cst_19 {dimension_numbers = #tpu.dot_dimension_numbers<[1], [0], [0], [1], [0, 0, 1, 1], [], []>} : vector<1x128xbf16>, vector<128x128xbf16>, vector<1x128xf32> -> vector<1x128xf32>
    %c3 = arith.constant 3 : index
    %c0_20 = arith.constant 0 : index
    %31 = vector.load %arg2[%c3, %c0_20] : memref<6x256xf32, #tpu.memory_space<vmem>>, vector<1x128xf32>
    %32 = arith.addf %30, %31 : vector<1x128xf32>
    %cst_21 = arith.constant 0.000000e+00 : f32
    %33 = vector.broadcast %cst_21 : f32 to vector<1x128xf32>
    %34 = arith.maximumf %32, %33 : vector<1x128xf32>
    %c5 = arith.constant 5 : index
    %c0_22 = arith.constant 0 : index
    %35 = vector.load %arg2[%c5, %c0_22] : memref<6x256xf32, #tpu.memory_space<vmem>>, vector<1x128xf32>
    %36 = arith.mulf %34, %35 : vector<1x128xf32>
    %cst_23 = arith.constant dense<0.000000e+00> : vector<1xf32>
    %37 = vector.multi_reduction <add>, %36, %cst_23 [1] : vector<1x128xf32> to vector<1xf32>
    %38 = vector.shape_cast %37 : vector<1xf32> to vector<1x1xf32>
    %c4 = arith.constant 4 : index
    %c0_24 = arith.constant 0 : index
    %39 = vector.load %arg2[%c4, %c0_24] : memref<6x256xf32, #tpu.memory_space<vmem>>, vector<1x1xf32>
    %40 = arith.addf %38, %39 : vector<1x1xf32>
    %c0_25 = arith.constant 0 : index
    %c0_26 = arith.constant 0 : index
    %41 = vector.load %arg3[%c0_25, %c0_26] : memref<1x1xf32, #tpu.memory_space<vmem>>, vector<1x1xf32>
    tpu.vector_store %arg3[%c0_25, %c0_26], %40 {strides = array<i32>} : memref<1x1xf32, #tpu.memory_space<vmem>>, vector<1x1xf32>,
    return
  }
}

</mosaic_0001>

<llo_original>
// kernel: critic_forward.1
$region0: #{critic_forward.1}
  #allocation0 [shape = 'u32[]', space=smem, size = 0x4, offset = 0x4, fixed_abs, tag = 'smem constant byte address 0x4 - core index']
  #allocation1 [shape = 'u32[72,128]{1,0:T(1,128)}', space=vmem, size = 0x9000, scoped, tag = 'internal scratch']
  %s0 = inlined_call_operand.vmem [shape: bf16[1,128], index: 0, kind: input, shape index: {}]
  %s1 = inlined_call_operand.hbm [shape: bf16[384,384], index: 1, kind: input, shape index: {}]
  %s2 = inlined_call_operand.hbm [shape: f32[6,256], index: 2, kind: input, shape index: {}]
  %s3 = inlined_call_operand.hbm [shape: f32[1,1], index: 3, kind: output, shape index: {}]
  %s4 = sld [smem:[#allocation0]]
  $region30: #{critic_forward.1} parent=0
    _
  %s6 = ssub.s32 1, %s4
  %s7 = scalar_select 0, %s6, %s4
  $region1: #{critic_forward.1} parent=0
    #allocation2 [shape = 'u8[294912]{0}', space=vmem, size = 0x48000, scoped, tag = 'input window, operand 1, single buffered']
    #allocation3 [shape = 's32[1]{0}', space=sflag, size = 0x4, scoped, tag = 'scoped memory for critic_forward.1']
    #allocation4 [shape = 's32[1]{0}', space=sflag, size = 0x4, scoped, tag = 'scoped memory for critic_forward.1']
    #allocation5 [shape = 'u8[8192]{0}', space=vmem, size = 0x2000, scoped, tag = 'input window, operand 2, single buffered']
    #allocation6 [shape = 's32[1]{0}', space=sflag, size = 0x4, scoped, tag = 'scoped memory for critic_forward.1']
    #allocation7 [shape = 'u8[512]{0}', space=vmem, size = 0x400, scoped, tag = 'output window, operand 0, single buffered']
    %8 = vsyncpa [#allocation3], 0
    %9 = vsyncpa [#allocation6], 0
    %10 = vsyncpa [#allocation4], 0
    // Predicated region
    $region2: #{critic_forward.1} parent=1 // pred_check
      _
    $region3: #{critic_forward.1} parent=1 // pred_check_branch
      %12 = sbr.rel (0) target = $region5
    $region4: #{critic_forward.1} parent=1 // pred_region
      _
    $region5: #{critic_forward.1} parent=1 // pred_fallthru
      _
    // Predicated region
    $region6: #{critic_forward.1} parent=1 // pred_check
      _
    $region7: #{critic_forward.1} parent=1 // pred_check_branch
      %14 = sbr.rel (0) target = $region9
    $region8: #{critic_forward.1} parent=1 // pred_region
      %16 = vsyncadd [#allocation3], 0
      %s17 = sshll.u32 %s1, 4
      %s18 = int_to_ptr.hbm [resolvable:$true] %s17
      %s19 = sshll.u32 [#allocation2], 4
      %s20 = int_to_ptr.vmem [resolvable:$true] %s19
      %25 = dma.hbm_to_vmem [thread:$0]  %s18, 9216, %s20, [#allocation3], 192, 192, 12
    $region9: #{critic_forward.1} parent=1 // pred_fallthru
      _
    // Predicated region
    $region10: #{critic_forward.1} parent=1 // pred_check
      _
    $region11: #{critic_forward.1} parent=1 // pred_check_branch
      %27 = sbr.rel (0) target = $region13
    $region12: #{critic_forward.1} parent=1 // pred_region
      %29 = vsyncadd [#allocation6], 0
      %s31 = sshll.u32 %s2, 4
      %s32 = int_to_ptr.hbm [resolvable:$true] %s31
      %s33 = sshll.u32 [#allocation5], 4
      %s34 = int_to_ptr.vmem [resolvable:$true] %s33
      %36 = dma.hbm_to_vmem [thread:$0]  %s32, 256, %s34, [#allocation6]
    $region13: #{critic_forward.1} parent=1 // pred_fallthru
      _
    // Predicated region
    $region14: #{critic_forward.1} parent=1 // pred_check
      _
    $region15: #{critic_forward.1} parent=1 // pred_check_branch
      %38 = sbr.rel (0) target = $region17
    $region16: #{critic_forward.1} parent=1 // pred_region
      %40 = dma.done [#allocation3], 9216
    $region17: #{critic_forward.1} parent=1 // pred_fallthru
      _
    // Predicated region
    $region18: #{critic_forward.1} parent=1 // pred_check
      _
    $region19: #{critic_forward.1} parent=1 // pred_check_branch
      %42 = sbr.rel (0) target = $region21
    $region20: #{critic_forward.1} parent=1 // pred_region
      %44 = dma.done [#allocation6], 256
    $region21: #{critic_forward.1} parent=1 // pred_fallthru
      _
    %v45 = vld [vmem:[%s0] sm:$0x1]
    %v46 = vld [vmem:[#allocation2] sm:$0xff]
    %v47 = vld [vmem:[#allocation2 + $0x8] sm:$0xf]
    %v48 = vld [vmem:[#allocation2 + $0xc] sm:$0xff]
    %v49 = vld [vmem:[#allocation2 + $0x14] sm:$0xf]
    %v50 = vld [vmem:[#allocation2 + $0x18] sm:$0xff]
    %v51 = vld [vmem:[#allocation2 + $0x20] sm:$0xf]
    %v52 = vld [vmem:[#allocation2 + $0x24] sm:$0xff]
    %v53 = vld [vmem:[#allocation2 + $0x2c] sm:$0xf]
    %v54 = vld [vmem:[#allocation2 + $0x30] sm:$0xff]
    %v55 = vld [vmem:[#allocation2 + $0x38] sm:$0xf]
    %v56 = vld [vmem:[#allocation2 + $0x3c] sm:$0xff]
    %v57 = vld [vmem:[#allocation2 + $0x44] sm:$0xf]
    %v58 = vld [vmem:[#allocation2 + $0x48] sm:$0xff]
    %v59 = vld [vmem:[#allocation2 + $0x50] sm:$0xf]
    %v60 = vld [vmem:[#allocation2 + $0x54] sm:$0xff]
    %v61 = vld [vmem:[#allocation2 + $0x5c] sm:$0xf]
    %v62 = vld [vmem:[#allocation2 + $0x60] sm:$0xff]
    %v63 = vld [vmem:[#allocation2 + $0x68] sm:$0xf]
    %v64 = vld [vmem:[#allocation2 + $0x6c] sm:$0xff]
    %v65 = vld [vmem:[#allocation2 + $0x74] sm:$0xf]
    %v66 = vld [vmem:[#allocation2 + $0x78] sm:$0xff]
    %v67 = vld [vmem:[#allocation2 + $0x80] sm:$0xf]
    %v68 = vld [vmem:[#allocation2 + $0x84] sm:$0xff]
    %v69 = vld [vmem:[#allocation2 + $0x8c] sm:$0xf]
    %v70 = vld [vmem:[#allocation2 + $0x90] sm:$0xff]
    %v71 = vld [vmem:[#allocation2 + $0x98] sm:$0xf]
    %v72 = vld [vmem:[#allocation2 + $0x9c] sm:$0xff]
    %v73 = vld [vmem:[#allocation2 + $0xa4] sm:$0xf]
    %v74 = vld [vmem:[#allocation2 + $0xa8] sm:$0xff]
    %v75 = vld [vmem:[#allocation2 + $0xb0] sm:$0xf]
    %v76 = vld [vmem:[#allocation2 + $0xb4] sm:$0xff]
    %v77 = vld [vmem:[#allocation2 + $0xbc] sm:$0xf]
    %v110 = vunpack.c.l.b16 %v46
    %v111 = vunpack.c.h.b16 %v46
    %v112 = vunpack.c.l.b16 %v47
    %v113 = vunpack.c.l.b16 %v48
    %v114 = vunpack.c.h.b16 %v48
    %v115 = vunpack.c.l.b16 %v49
    %v116 = vunpack.c.l.b16 %v50
    %v117 = vunpack.c.h.b16 %v50
    %v118 = vunpack.c.l.b16 %v51
    %v119 = vunpack.c.l.b16 %v52
    %v120 = vunpack.c.h.b16 %v52
    %v121 = vunpack.c.l.b16 %v53
    %v122 = vunpack.c.l.b16 %v54
    %v123 = vunpack.c.h.b16 %v54
    %v124 = vunpack.c.l.b16 %v55
    %v125 = vunpack.c.l.b16 %v56
    %v126 = vunpack.c.h.b16 %v56
    %v127 = vunpack.c.l.b16 %v57
    %v128 = vunpack.c.l.b16 %v58
    %v129 = vunpack.c.h.b16 %v58
    %v130 = vunpack.c.l.b16 %v59
    %v131 = vunpack.c.l.b16 %v60
    %v132 = vunpack.c.h.b16 %v60
    %v133 = vunpack.c.l.b16 %v61
    %v134 = vunpack.c.l.b16 %v62
    %v135 = vunpack.c.h.b16 %v62
    %v136 = vunpack.c.l.b16 %v63
    %v137 = vunpack.c.l.b16 %v64
    %v138 = vunpack.c.h.b16 %v64
    %v139 = vunpack.c.l.b16 %v65
    %v140 = vunpack.c.l.b16 %v66
    %v141 = vunpack.c.h.b16 %v66
    %v142 = vunpack.c.l.b16 %v67
    %v143 = vunpack.c.l.b16 %v68
    %v144 = vunpack.c.h.b16 %v68
    %v145 = vunpack.c.l.b16 %v69
    %v146 = vunpack.c.l.b16 %v70
    %v147 = vunpack.c.h.b16 %v70
    %v148 = vunpack.c.l.b16 %v71
    %v149 = vunpack.c.l.b16 %v72
    %v150 = vunpack.c.h.b16 %v72
    %v151 = vunpack.c.l.b16 %v73
    %v152 = vunpack.c.l.b16 %v74
    %v153 = vunpack.c.h.b16 %v74
    %v154 = vunpack.c.l.b16 %v75
    %v155 = vunpack.c.l.b16 %v76
    %v156 = vunpack.c.h.b16 %v76
    %v157 = vunpack.c.l.b16 %v77
    %v158 = vpack.c.b16 %v113, %v110
    %v159 = vpack.c.b16 %v114, %v111
    %v160 = vpack.c.b16 %v115, %v112
    %v161 = vpack.c.b16 %v119, %v116
    %v162 = vpack.c.b16 %v120, %v117
    %v163 = vpack.c.b16 %v121, %v118
    %v164 = vpack.c.b16 %v125, %v122
    %v165 = vpack.c.b16 %v126, %v123
    %v166 = vpack.c.b16 %v127, %v124
    %v167 = vpack.c.b16 %v131, %v128
    %v168 = vpack.c.b16 %v132, %v129
    %v169 = vpack.c.b16 %v133, %v130
    %v170 = vpack.c.b16 %v137, %v134
    %v171 = vpack.c.b16 %v138, %v135
    %v172 = vpack.c.b16 %v139, %v136
    %v173 = vpack.c.b16 %v143, %v140
    %v174 = vpack.c.b16 %v144, %v141
    %v175 = vpack.c.b16 %v145, %v142
    %v176 = vpack.c.b16 %v149, %v146
    %v177 = vpack.c.b16 %v150, %v147
    %v178 = vpack.c.b16 %v151, %v148
    %v179 = vpack.c.b16 %v155, %v152
    %v180 = vpack.c.b16 %v156, %v153
    %v181 = vpack.c.b16 %v157, %v154
    %206 = vmatpush.bf16.msra.mxu0 %v179
    %207 = vmatpush.bf16.msra.mxu0 %v176
    %208 = vmatpush.bf16.msra.mxu0 %v173
    %209 = vmatpush.bf16.msra.mxu0 %v170
    %210 = vmatpush.bf16.msra.mxu0 %v167
    %211 = vmatpush.bf16.msra.mxu0 %v164
    %212 = vmatpush.bf16.msra.mxu0 %v161
    %213 = vmatpush.bf16.msra.mxu0 %v158
    %214 = vmatmul.bf16.gmra.mxu0 %v45
    %v215 = vpop.f32.mrf.mxu0
    %v216 = vadd.f32 0.0, %v215
    %v217 = vpop.f32.mrf.mxu0
    %218 = vdwg.mxu0
    %219 = vmatpush.bf16.msra.mxu0 %v180
    %220 = vmatpush.bf16.msra.mxu0 %v177
    %221 = vmatpush.bf16.msra.mxu0 %v174
    %222 = vmatpush.bf16.msra.mxu0 %v171
    %223 = vmatpush.bf16.msra.mxu0 %v168
    %224 = vmatpush.bf16.msra.mxu0 %v165
    %225 = vmatpush.bf16.msra.mxu0 %v162
    %226 = vmatpush.bf16.msra.mxu0 %v159
    %227 = vmatmul.bf16.gmra.mxu0 %v45
    %v228 = vpop.f32.mrf.mxu0
    %v229 = vadd.f32 0.0, %v228
    %v230 = vpop.f32.mrf.mxu0
    %231 = vdwg.mxu0
    %232 = vmatpush.bf16.msra.mxu0 %v181
    %233 = vmatpush.bf16.msra.mxu0 %v178
    %234 = vmatpush.bf16.msra.mxu0 %v175
    %235 = vmatpush.bf16.msra.mxu0 %v172
    %236 = vmatpush.bf16.msra.mxu0 %v169
    %237 = vmatpush.bf16.msra.mxu0 %v166
    %238 = vmatpush.bf16.msra.mxu0 %v163
    %239 = vmatpush.bf16.msra.mxu0 %v160
    %240 = vmatmul.bf16.gmra.mxu0 %v45
    %v241 = vpop.f32.mrf.mxu0
    %v242 = vadd.f32 0.0, %v241
    %v243 = vpop.f32.mrf.mxu0
    %244 = vdwg.mxu0
    %v245 = vld [vmem:[#allocation5] ss:$8 sm:$0x3]
    %v247 = vperm.slane %v245, 0
    %v248 = vperm.slane %v245, 1
    %v251 = vadd.f32 %v216, %v247
    %v252 = vadd.f32 %v229, %v248
    %v253 = vmax.f32 %v251, 0.0
    %v254 = vmax.f32 %v252, 0.0
    %v255 = vld [vmem:[#allocation5 + $0x9] ss:$0 sm:$0xff]
    %v256 = vadd.f32 %v242, %v255
    %v257 = vmax.f32 %v256, 0.0
    %v258 = vpack.c.bf16 %v253, %v253
    %v259 = vpack.c.bf16 %v254, %v254
    %v260 = vld [vmem:[#allocation2 + $0xc0] sm:$0xf]
    %v261 = vld [vmem:[#allocation2 + $0xcc] sm:$0xf]
    %v262 = vld [vmem:[#allocation2 + $0xd8] sm:$0xf]
    %v263 = vld [vmem:[#allocation2 + $0xe4] sm:$0xf]
    %v264 = vld [vmem:[#allocation2 + $0xf0] sm:$0xf]
    %v265 = vld [vmem:[#allocation2 + $0xfc] sm:$0xf]
    %v266 = vld [vmem:[#allocation2 + $0x108] sm:$0xf]
    %v267 = vld [vmem:[#allocation2 + $0x114] sm:$0xf]
    %v268 = vld [vmem:[#allocation2 + $0x120] sm:$0xf]
    %v269 = vld [vmem:[#allocation2 + $0x12c] sm:$0xf]
    %v270 = vld [vmem:[#allocation2 + $0x138] sm:$0xf]
    %v271 = vld [vmem:[#allocation2 + $0x144] sm:$0xf]
    %v272 = vld [vmem:[#allocation2 + $0x150] sm:$0xf]
    %v273 = vld [vmem:[#allocation2 + $0x15c] sm:$0xf]
    %v274 = vld [vmem:[#allocation2 + $0x168] sm:$0xf]
    %v275 = vld [vmem:[#allocation2 + $0x174] sm:$0xf]
    %v276 = vld [vmem:[#allocation2 + $0x180] sm:$0xf]
    %v277 = vld [vmem:[#allocation2 + $0x18c] sm:$0xf]
    %v278 = vld [vmem:[#allocation2 + $0x198] sm:$0xf]
    %v279 = vld [vmem:[#allocation2 + $0x1a4] sm:$0xf]
    %v280 = vld [vmem:[#allocation2 + $0x1b0] sm:$0xf]
    %v281 = vld [vmem:[#allocation2 + $0x1bc] sm:$0xf]
    %v282 = vld [vmem:[#allocation2 + $0x1c8] sm:$0xf]
    %v283 = vld [vmem:[#allocation2 + $0x1d4] sm:$0xf]
    %v284 = vld [vmem:[#allocation2 + $0x1e0] sm:$0xf]
    %v285 = vld [vmem:[#allocation2 + $0x1ec] sm:$0xf]
    %v286 = vld [vmem:[#allocation2 + $0x1f8] sm:$0xf]
    %v287 = vld [vmem:[#allocation2 + $0x204] sm:$0xf]
    %v288 = vld [vmem:[#allocation2 + $0x210] sm:$0xf]
    %v289 = vld [vmem:[#allocation2 + $0x21c] sm:$0xf]
    %v290 = vld [vmem:[#allocation2 + $0x228] sm:$0xf]
    %v291 = vld [vmem:[#allocation2 + $0x234] sm:$0xf]
    %v292 = vld [vmem:[#allocation5 + $0x1] ss:$0 sm:$0xff]
    %v325 = vunpack.c.l.b16 %v260
    %v326 = vunpack.c.l.b16 %v261
    %v327 = vunpack.c.l.b16 %v262
    %v328 = vunpack.c.l.b16 %v263
    %v329 = vunpack.c.l.b16 %v264
    %v330 = vunpack.c.l.b16 %v265
    %v331 = vunpack.c.l.b16 %v266
    %v332 = vunpack.c.l.b16 %v267
    %v333 = vunpack.c.l.b16 %v268
    %v334 = vunpack.c.l.b16 %v269
    %v335 = vunpack.c.l.b16 %v270
    %v336 = vunpack.c.l.b16 %v271
    %v337 = vunpack.c.l.b16 %v272
    %v338 = vunpack.c.l.b16 %v273
    %v339 = vunpack.c.l.b16 %v274
    %v340 = vunpack.c.l.b16 %v275
    %v341 = vunpack.c.l.b16 %v276
    %v342 = vunpack.c.l.b16 %v277
    %v343 = vunpack.c.l.b16 %v278
    %v344 = vunpack.c.l.b16 %v279
    %v345 = vunpack.c.l.b16 %v280
    %v346 = vunpack.c.l.b16 %v281
    %v347 = vunpack.c.l.b16 %v282
    %v348 = vunpack.c.l.b16 %v283
    %v349 = vunpack.c.l.b16 %v284
    %v350 = vunpack.c.l.b16 %v285
    %v351 = vunpack.c.l.b16 %v286
    %v352 = vunpack.c.l.b16 %v287
    %v353 = vunpack.c.l.b16 %v288
    %v354 = vunpack.c.l.b16 %v289
    %v355 = vunpack.c.l.b16 %v290
    %v356 = vunpack.c.l.b16 %v291
    %v357 = vpack.c.b16 %v326, %v325
    %v358 = vpack.c.b16 %v328, %v327
    %v359 = vpack.c.b16 %v330, %v329
    %v360 = vpack.c.b16 %v332, %v331
    %v361 = vpack.c.b16 %v334, %v333
    %v362 = vpack.c.b16 %v336, %v335
    %v363 = vpack.c.b16 %v338, %v337
    %v364 = vpack.c.b16 %v340, %v339
    %v365 = vpack.c.b16 %v342, %v341
    %v366 = vpack.c.b16 %v344, %v343
    %v367 = vpack.c.b16 %v346, %v345
    %v368 = vpack.c.b16 %v348, %v347
    %v369 = vpack.c.b16 %v350, %v349
    %v370 = vpack.c.b16 %v352, %v351
    %v371 = vpack.c.b16 %v354, %v353
    %v372 = vpack.c.b16 %v356, %v355
    %389 = vmatpush.bf16.msra.mxu0 %v364
    %390 = vmatpush.bf16.msra.mxu0 %v363
    %391 = vmatpush.bf16.msra.mxu0 %v362
    %392 = vmatpush.bf16.msra.mxu0 %v361
    %393 = vmatpush.bf16.msra.mxu0 %v360
    %394 = vmatpush.bf16.msra.mxu0 %v359
    %395 = vmatpush.bf16.msra.mxu0 %v358
    %396 = vmatpush.bf16.msra.mxu0 %v357
    %397 = vmatmul.bf16.gmra.mxu0 %v258
    %v398 = vpop.f32.mrf.mxu0
    %v399 = vadd.f32 %v292, %v398
    %v400 = vpop.f32.mrf.mxu0
    %401 = vdwg.mxu0
    %402 = vmatpush.bf16.msra.mxu0 %v372
    %403 = vmatpush.bf16.msra.mxu0 %v371
    %404 = vmatpush.bf16.msra.mxu0 %v370
    %405 = vmatpush.bf16.msra.mxu0 %v369
    %406 = vmatpush.bf16.msra.mxu0 %v368
    %407 = vmatpush.bf16.msra.mxu0 %v367
    %408 = vmatpush.bf16.msra.mxu0 %v366
    %409 = vmatpush.bf16.msra.mxu0 %v365
    %410 = vmatmul.bf16.gmra.mxu0 %v259
    %v411 = vpop.f32.mrf.mxu0
    %v412 = vadd.f32 %v399, %v411
    %v413 = vpop.f32.mrf.mxu0
    %414 = vdwg.mxu0
    %v415 = vmax.f32 %v412, 0.0
    %v416 = vpack.c.bf16 %v415, %v415
    %v417 = vpack.c.bf16 %v257, %v257
    %v418 = vld [vmem:[#allocation2 + $0xc4] sm:$0xf]
    %v419 = vld [vmem:[#allocation2 + $0xd0] sm:$0xf]
    %v420 = vld [vmem:[#allocation2 + $0xdc] sm:$0xf]
    %v421 = vld [vmem:[#allocation2 + $0xe8] sm:$0xf]
    %v422 = vld [vmem:[#allocation2 + $0xf4] sm:$0xf]
    %v423 = vld [vmem:[#allocation2 + $0x100] sm:$0xf]
    %v424 = vld [vmem:[#allocation2 + $0x10c] sm:$0xf]
    %v425 = vld [vmem:[#allocation2 + $0x118] sm:$0xf]
    %v426 = vld [vmem:[#allocation2 + $0x124] sm:$0xf]
    %v427 = vld [vmem:[#allocation2 + $0x130] sm:$0xf]
    %v428 = vld [vmem:[#allocation2 + $0x13c] sm:$0xf]
    %v429 = vld [vmem:[#allocation2 + $0x148] sm:$0xf]
    %v430 = vld [vmem:[#allocation2 + $0x154] sm:$0xf]
    %v431 = vld [vmem:[#allocation2 + $0x160] sm:$0xf]
    %v432 = vld [vmem:[#allocation2 + $0x16c] sm:$0xf]
    %v433 = vld [vmem:[#allocation2 + $0x178] sm:$0xf]
    %v434 = vld [vmem:[#allocation2 + $0x184] sm:$0xf]
    %v435 = vld [vmem:[#allocation2 + $0x190] sm:$0xf]
    %v436 = vld [vmem:[#allocation2 + $0x19c] sm:$0xf]
    %v437 = vld [vmem:[#allocation2 + $0x1a8] sm:$0xf]
    %v438 = vld [vmem:[#allocation2 + $0x1b4] sm:$0xf]
    %v439 = vld [vmem:[#allocation2 + $0x1c0] sm:$0xf]
    %v440 = vld [vmem:[#allocation2 + $0x1cc] sm:$0xf]
    %v441 = vld [vmem:[#allocation2 + $0x1d8] sm:$0xf]
    %v442 = vld [vmem:[#allocation2 + $0x1e4] sm:$0xf]
    %v443 = vld [vmem:[#allocation2 + $0x1f0] sm:$0xf]
    %v444 = vld [vmem:[#allocation2 + $0x1fc] sm:$0xf]
    %v445 = vld [vmem:[#allocation2 + $0x208] sm:$0xf]
    %v446 = vld [vmem:[#allocation2 + $0x214] sm:$0xf]
    %v447 = vld [vmem:[#allocation2 + $0x220] sm:$0xf]
    %v448 = vld [vmem:[#allocation2 + $0x22c] sm:$0xf]
    %v449 = vld [vmem:[#allocation2 + $0x238] sm:$0xf]
    %v450 = vld [vmem:[#allocation5 + $0x2] ss:$0 sm:$0xff]
    %v483 = vunpack.c.l.b16 %v418
    %v484 = vunpack.c.l.b16 %v419
    %v485 = vunpack.c.l.b16 %v420
    %v486 = vunpack.c.l.b16 %v421
    %v487 = vunpack.c.l.b16 %v422
    %v488 = vunpack.c.l.b16 %v423
    %v489 = vunpack.c.l.b16 %v424
    %v490 = vunpack.c.l.b16 %v425
    %v491 = vunpack.c.l.b16 %v426
    %v492 = vunpack.c.l.b16 %v427
    %v493 = vunpack.c.l.b16 %v428
    %v494 = vunpack.c.l.b16 %v429
    %v495 = vunpack.c.l.b16 %v430
    %v496 = vunpack.c.l.b16 %v431
    %v497 = vunpack.c.l.b16 %v432
    %v498 = vunpack.c.l.b16 %v433
    %v499 = vunpack.c.l.b16 %v434
    %v500 = vunpack.c.l.b16 %v435
    %v501 = vunpack.c.l.b16 %v436
    %v502 = vunpack.c.l.b16 %v437
    %v503 = vunpack.c.l.b16 %v438
    %v504 = vunpack.c.l.b16 %v439
    %v505 = vunpack.c.l.b16 %v440
    %v506 = vunpack.c.l.b16 %v441
    %v507 = vunpack.c.l.b16 %v442
    %v508 = vunpack.c.l.b16 %v443
    %v509 = vunpack.c.l.b16 %v444
    %v510 = vunpack.c.l.b16 %v445
    %v511 = vunpack.c.l.b16 %v446
    %v512 = vunpack.c.l.b16 %v447
    %v513 = vunpack.c.l.b16 %v448
    %v514 = vunpack.c.l.b16 %v449
    %v515 = vpack.c.b16 %v484, %v483
    %v516 = vpack.c.b16 %v486, %v485
    %v517 = vpack.c.b16 %v488, %v487
    %v518 = vpack.c.b16 %v490, %v489
    %v519 = vpack.c.b16 %v492, %v491
    %v520 = vpack.c.b16 %v494, %v493
    %v521 = vpack.c.b16 %v496, %v495
    %v522 = vpack.c.b16 %v498, %v497
    %v523 = vpack.c.b16 %v500, %v499
    %v524 = vpack.c.b16 %v502, %v501
    %v525 = vpack.c.b16 %v504, %v503
    %v526 = vpack.c.b16 %v506, %v505
    %v527 = vpack.c.b16 %v508, %v507
    %v528 = vpack.c.b16 %v510, %v509
    %v529 = vpack.c.b16 %v512, %v511
    %v530 = vpack.c.b16 %v514, %v513
    %547 = vmatpush.bf16.msra.mxu0 %v522
    %548 = vmatpush.bf16.msra.mxu0 %v521
    %549 = vmatpush.bf16.msra.mxu0 %v520
    %550 = vmatpush.bf16.msra.mxu0 %v519
    %551 = vmatpush.bf16.msra.mxu0 %v518
    %552 = vmatpush.bf16.msra.mxu0 %v517
    %553 = vmatpush.bf16.msra.mxu0 %v516
    %554 = vmatpush.bf16.msra.mxu0 %v515
    %555 = vmatmul.bf16.gmra.mxu0 %v416
    %v556 = vpop.f32.mrf.mxu0
    %v557 = vadd.f32 %v450, %v556
    %v558 = vpop.f32.mrf.mxu0
    %559 = vdwg.mxu0
    %560 = vmatpush.bf16.msra.mxu0 %v530
    %561 = vmatpush.bf16.msra.mxu0 %v529
    %562 = vmatpush.bf16.msra.mxu0 %v528
    %563 = vmatpush.bf16.msra.mxu0 %v527
    %564 = vmatpush.bf16.msra.mxu0 %v526
    %565 = vmatpush.bf16.msra.mxu0 %v525
    %566 = vmatpush.bf16.msra.mxu0 %v524
    %567 = vmatpush.bf16.msra.mxu0 %v523
    %568 = vmatmul.bf16.gmra.mxu0 %v417
    %v569 = vpop.f32.mrf.mxu0
    %v570 = vadd.f32 %v557, %v569
    %v571 = vpop.f32.mrf.mxu0
    %572 = vdwg.mxu0
    %v573 = vmax.f32 %v570, 0.0
    %v574 = vpack.c.bf16 %v573, %v573
    %v575 = vld [vmem:[#allocation2 + $0xc8] sm:$0xf]
    %v576 = vld [vmem:[#allocation2 + $0xd4] sm:$0xf]
    %v577 = vld [vmem:[#allocation2 + $0xe0] sm:$0xf]
    %v578 = vld [vmem:[#allocation2 + $0xec] sm:$0xf]
    %v579 = vld [vmem:[#allocation2 + $0xf8] sm:$0xf]
    %v580 = vld [vmem:[#allocation2 + $0x104] sm:$0xf]
    %v581 = vld [vmem:[#allocation2 + $0x110] sm:$0xf]
    %v582 = vld [vmem:[#allocation2 + $0x11c] sm:$0xf]
    %v583 = vld [vmem:[#allocation2 + $0x128] sm:$0xf]
    %v584 = vld [vmem:[#allocation2 + $0x134] sm:$0xf]
    %v585 = vld [vmem:[#allocation2 + $0x140] sm:$0xf]
    %v586 = vld [vmem:[#allocation2 + $0x14c] sm:$0xf]
    %v587 = vld [vmem:[#allocation2 + $0x158] sm:$0xf]
    %v588 = vld [vmem:[#allocation2 + $0x164] sm:$0xf]
    %v589 = vld [vmem:[#allocation2 + $0x170] sm:$0xf]
    %v590 = vld [vmem:[#allocation2 + $0x17c] sm:$0xf]
    %v591 = vld [vmem:[#allocation5 + $0x3] ss:$0 sm:$0xff]
    %v608 = vunpack.c.l.b16 %v575
    %v609 = vunpack.c.l.b16 %v576
    %v610 = vunpack.c.l.b16 %v577
    %v611 = vunpack.c.l.b16 %v578
    %v612 = vunpack.c.l.b16 %v579
    %v613 = vunpack.c.l.b16 %v580
    %v614 = vunpack.c.l.b16 %v581
    %v615 = vunpack.c.l.b16 %v582
    %v616 = vunpack.c.l.b16 %v583
    %v617 = vunpack.c.l.b16 %v584
    %v618 = vunpack.c.l.b16 %v585
    %v619 = vunpack.c.l.b16 %v586
    %v620 = vunpack.c.l.b16 %v587
    %v621 = vunpack.c.l.b16 %v588
    %v622 = vunpack.c.l.b16 %v589
    %v623 = vunpack.c.l.b16 %v590
    %v624 = vpack.c.b16 %v609, %v608
    %v625 = vpack.c.b16 %v611, %v610
    %v626 = vpack.c.b16 %v613, %v612
    %v627 = vpack.c.b16 %v615, %v614
    %v628 = vpack.c.b16 %v617, %v616
    %v629 = vpack.c.b16 %v619, %v618
    %v630 = vpack.c.b16 %v621, %v620
    %v631 = vpack.c.b16 %v623, %v622
    %640 = vmatpush.bf16.msra.mxu0 %v631
    %641 = vmatpush.bf16.msra.mxu0 %v630
    %642 = vmatpush.bf16.msra.mxu0 %v629
    %643 = vmatpush.bf16.msra.mxu0 %v628
    %644 = vmatpush.bf16.msra.mxu0 %v627
    %645 = vmatpush.bf16.msra.mxu0 %v626
    %646 = vmatpush.bf16.msra.mxu0 %v625
    %647 = vmatpush.bf16.msra.mxu0 %v624
    %648 = vmatmul.bf16.gmra.mxu0 %v574
    %v649 = vpop.f32.mrf.mxu0
    %v650 = vadd.f32 %v591, %v649
    %v651 = vpop.f32.mrf.mxu0
    %652 = vdwg.mxu0
    %v653 = vmax.f32 %v650, 0.0
    %v654 = vld [vmem:[#allocation5 + $0x5] ss:$0 sm:$0xff]
    %v655 = vmul.f32 %v653, %v654
    %vm656 = vcmask 1040384
    %v657 = vsel %vm656, %v655, 0.0
    %658 = vadd.xlane.f32.xlu0 %v657
    %v659 = vpop.xlane.xlu0 %658
    %v660 = vld [vmem:[#allocation5 + $0x4] ss:$0 sm:$0xff]
    %v661 = vadd.f32 %v659, %v660
    %vm662 = vcmask 0
    %663 = vst.msk [vmem:[#allocation7] sm:$0x1] %vm662, %v661
    // Predicated region
    $region22: #{critic_forward.1} parent=1 // pred_check
      _
    $region23: #{critic_forward.1} parent=1 // pred_check_branch
      %665 = sbr.rel (0) target = $region25
    $region24: #{critic_forward.1} parent=1 // pred_region
      %667 = vsyncadd [#allocation4], 0
      %s669 = sshll.u32 [#allocation7], 4
      %s670 = int_to_ptr.vmem [resolvable:$true] %s669
      %s671 = sshll.u32 %s3, 4
      %s672 = int_to_ptr.hbm [resolvable:$true] %s671
      %674 = dma.vmem_to_hbm [thread:$0]  %s670, 16, %s672, [#allocation4]
    $region25: #{critic_forward.1} parent=1 // pred_fallthru
      _
    // Predicated region
    $region26: #{critic_forward.1} parent=1 // pred_check
      _
    $region27: #{critic_forward.1} parent=1 // pred_check_branch
      %676 = sbr.rel (0) target = $region29
    $region28: #{critic_forward.1} parent=1 // pred_region
      %678 = dma.done [#allocation4], 16
    $region29: #{critic_forward.1} parent=1 // pred_fallthru
      _
    %679 = vsyncpa [#allocation3], 1
    %680 = vsyncpa [#allocation6], 1
    %681 = vsyncpa [#allocation4], 1

</llo_original>
